<compile_context>
chip_gen: v7x
topology: tpu7x:2x2x1
jax: 0.10.0
libtpu: 0.0.40
codegen_flags: <defaults>
</compile_context>

<pallas_src>
import math

import jax
import jax.numpy as jnp
from jax import lax
from jax.experimental import pallas as pl
from jax.experimental.pallas import tpu as pltpu

KH = KW = 3
PAD = 1
LEAKY_SLOPE = 0.01   # nn.LeakyReLU() default
BN_EPS = 1e-5        # nn.BatchNorm2d default
LANES = 128

TARGET_ROWS1 = 1024  # matmul M rows per pass-1 tile
TARGET_ROWS2 = 4096  # pixel rows per pass-2 tile (mem-bound elementwise)
VMEM_LIMIT = 48 * 1024 * 1024   # fits v7x 64 MiB physical; raises v5e 16 MiB default


def _round_up(x, m):
    return (x + m - 1) // m * m


def _pick_tr1(R1, W):
    """Rows (of N*H) per pass-1 tile: (TR1*W) % 8 == 0, ~TARGET_ROWS1 pixels."""
    w_mult = 8 // math.gcd(W, 8)          # smallest t with (t*W) % 8 == 0
    tr = max(w_mult, (TARGET_ROWS1 // max(W, 1)) // w_mult * w_mult)
    tr = min(tr, _round_up(R1, w_mult))   # don't exceed the (padded) problem
    if R1 >= 2 * w_mult:                  # keep >=2 grid steps for megacore
        tr = min(tr, _round_up((R1 + 1) // 2, w_mult))
    return max(tr, w_mult)


def _pick_tr2(NT1, rows_t1):
    """Pixel rows per pass-2 tile: multiple of the pass-1 tile, ~TARGET_ROWS2."""
    k = max(1, TARGET_ROWS2 // rows_t1)
    if NT1 >= 2:
        k = min(k, max(1, NT1 // 2))      # keep >=2 grid steps
    k = min(k, NT1)
    while NT1 % k:
        k -= 1
    return k * rows_t1


# ---------------------------------------------------------------------------
# Pass 1: conv as one fat matmul per tile + per-tile partial BN statistics.
# ---------------------------------------------------------------------------
def conv_stats_kernel(xw_ref, w_ref, conv_ref, stats_ref):
    # xw_ref:    (TR1, W, 9*Cin)   bf16 im2col rows for this tile
    # w_ref:     (9*Cin, Cout_p)   bf16
    # conv_ref:  (TR1*W, Cout_p)   bf16 conv output tile (HBM intermediate)
    # stats_ref: (1, 2, Cout_p)    f32 [sum, sum_sq] over this tile's pixels
    TR1, W, K = xw_ref.shape
    lhs = xw_ref[...].reshape(TR1 * W, K)             # major-dim collapse only
    acc = jnp.dot(lhs, w_ref[...], preferred_element_type=jnp.float32)
    conv_ref[...] = acc.astype(conv_ref.dtype)        # single store, bf16

    s1 = jnp.sum(acc, axis=0, keepdims=True)          # (1, Cout_p)
    s2 = jnp.sum(acc * acc, axis=0, keepdims=True)    # (1, Cout_p)
    stats_ref[...] = jnp.concatenate([s1, s2], axis=0).reshape(1, 2, acc.shape[1])


# ---------------------------------------------------------------------------
# Pass 2: fused BatchNorm normalize + LeakyReLU (lane-dense elementwise).
# ---------------------------------------------------------------------------
def bn_relu_kernel(conv_ref, scale_ref, shift_ref, out_ref):
    y = conv_ref[...].astype(jnp.float32) * scale_ref[...] + shift_ref[...]
    out_ref[...] = jnp.where(y > 0, y, LEAKY_SLOPE * y).astype(out_ref.dtype)


# ---------------------------------------------------------------------------
# Wrapper (PyTorch NCHW interface).
# ---------------------------------------------------------------------------
def basic_conv(x_nchw, weight_oihw, gamma, beta, *, compute_dtype=jnp.bfloat16):
    """x_nchw: (N, Cin, H, W); weight_oihw: (Cout, Cin, 3, 3) (PyTorch layouts)."""
    N, Cin, H, W = x_nchw.shape
    Cout = weight_oihw.shape[0]
    Cout_p = _round_up(Cout, LANES)
    K = KH * KW * Cin

    # ---- im2col in XLA (one pass): (N*H, W, 9*Cin), tap order (kh, kw, cin) --
    x_nhwc = jnp.transpose(x_nchw, (0, 2, 3, 1))
    xpad = jnp.pad(x_nhwc, ((0, 0), (PAD, PAD), (PAD, PAD), (0, 0)))
    taps = [xpad[:, kh:kh + H, kw:kw + W, :] for kh in range(KH) for kw in range(KW)]
    xw = jnp.concatenate(taps, axis=-1).astype(compute_dtype).reshape(N * H, W, K)

    # ---- row tiling (pad rows with zeros: exact for BN sums, sliced off later)
    R1 = N * H
    TR1 = _pick_tr1(R1, W)
    R1p = _round_up(R1, TR1)
    if R1p != R1:
        xw = jnp.pad(xw, ((0, R1p - R1), (0, 0), (0, 0)))
    NT1 = R1p // TR1
    R2 = R1p * W                                   # pixel rows of the intermediate

    # ---- weight OIHW -> (9*Cin, Cout_p), row order matches the im2col fold ---
    w2 = jnp.transpose(weight_oihw, (2, 3, 1, 0)).reshape(K, Cout)
    w2 = jnp.pad(w2, ((0, 0), (0, Cout_p - Cout))).astype(compute_dtype)

    # ---- pass 1: conv + partial stats ---------------------------------------
    ce1 = pl.CostEstimate(
        flops=2 * R2 * K * Cout_p, transcendentals=0,
        bytes_accessed=xw.size * 2 + w2.size * 2 + R2 * Cout_p * 2 + NT1 * 2 * Cout_p * 4)
    conv_flat, stats = pl.pallas_call(
        conv_stats_kernel,
        out_shape=(
            jax.ShapeDtypeStruct((R2, Cout_p), compute_dtype),       # bf16 intermediate
            jax.ShapeDtypeStruct((NT1, 2, Cout_p), jnp.float32),
        ),
        grid_spec=pltpu.PrefetchScalarGridSpec(
            num_scalar_prefetch=0,
            grid=(NT1,),
            in_specs=[
                pl.BlockSpec((TR1, W, K), lambda t: (t, 0, 0)),
                pl.BlockSpec((K, Cout_p), lambda t: (0, 0)),
            ],
            out_specs=[
                pl.BlockSpec((TR1 * W, Cout_p), lambda t: (t, 0)),
                pl.BlockSpec((1, 2, Cout_p), lambda t: (t, 0, 0)),
            ],
        ),
        compiler_params=pltpu.CompilerParams(
            dimension_semantics=("parallel",),
            vmem_limit_bytes=VMEM_LIMIT),
        cost_estimate=ce1,
    )(xw, w2)

    # ---- cross-tile BN statistics (tiny, plain JAX; Welford-style combine) ---
    M = N * H * W
    s1 = stats[:, 0, :]                                              # (NT1, Cout_p)
    s2 = stats[:, 1, :]
    counts = (jnp.minimum(TR1, R1 - jnp.arange(NT1) * TR1)
              .astype(jnp.float32) * W)[:, None]                     # true pixels/tile
    mean_t = s1 / counts
    m2_t = jnp.maximum(s2 - s1 * mean_t, 0.0)                        # within-tile M2
    mean = jnp.sum(s1, axis=0) / M
    var = (jnp.sum(m2_t, axis=0)
           + jnp.sum(counts * (mean_t - mean[None, :]) ** 2, axis=0)) / M
    var = jnp.maximum(var, 0.0)
    inv = lax.rsqrt(var + BN_EPS)
    gamma_p = jnp.pad(gamma.astype(jnp.float32), (0, Cout_p - Cout))
    beta_p = jnp.pad(beta.astype(jnp.float32), (0, Cout_p - Cout))
    scale = (gamma_p * inv).reshape(1, Cout_p)
    shift = (beta_p - mean * gamma_p * inv).reshape(1, Cout_p)

    # ---- pass 2: normalize + LeakyReLU (larger, decoupled tiles) -------------
    TR2 = _pick_tr2(NT1, TR1 * W)
    NT2 = R2 // TR2
    out_itemsize = jnp.dtype(x_nchw.dtype).itemsize
    ce2 = pl.CostEstimate(
        flops=4 * R2 * Cout_p, transcendentals=0,
        bytes_accessed=R2 * Cout_p * (2 + out_itemsize) + 2 * Cout_p * 4)
    out_flat = pl.pallas_call(
        bn_relu_kernel,
        out_shape=jax.ShapeDtypeStruct((R2, Cout_p), x_nchw.dtype),
        grid_spec=pltpu.PrefetchScalarGridSpec(
            num_scalar_prefetch=0,
            grid=(NT2,),
            in_specs=[
                pl.BlockSpec((TR2, Cout_p), lambda t: (t, 0)),
                pl.BlockSpec((1, Cout_p), lambda t: (0, 0)),
                pl.BlockSpec((1, Cout_p), lambda t: (0, 0)),
            ],
            out_specs=pl.BlockSpec((TR2, Cout_p), lambda t: (t, 0)),
        ),
        compiler_params=pltpu.CompilerParams(
            dimension_semantics=("parallel",),
            vmem_limit_bytes=VMEM_LIMIT),
        cost_estimate=ce2,
    )(conv_flat, scale, shift)

    # drop row/channel padding, back to NCHW (single fused XLA slice+transpose)
    out_nhwc = out_flat[:R1 * W, :Cout].reshape(N, H, W, Cout)
    return jnp.transpose(out_nhwc, (0, 3, 1, 2))


# ---------------------------------------------------------------------------
# f32 reference (mirrors the PyTorch module in train mode).
# ---------------------------------------------------------------------------
def _reference(x, weight, gamma, beta):
    conv = lax.conv_general_dilated(
        x, weight, window_strides=(1, 1), padding=((PAD, PAD), (PAD, PAD)),
        dimension_numbers=("NCHW", "OIHW", "NCHW"))
    mean = jnp.mean(conv, axis=(0, 2, 3), keepdims=True)
    var = jnp.mean((conv - mean) ** 2, axis=(0, 2, 3), keepdims=True)
    y = (conv - mean) * lax.rsqrt(var + BN_EPS)
    y = y * gamma.reshape(1, -1, 1, 1) + beta.reshape(1, -1, 1, 1)
    return jnp.where(y > 0, y, LEAKY_SLOPE * y)


if __name__ == "__main__":
    key = jax.random.PRNGKey(0)
    k1, k2 = jax.random.split(key)

    N, Cin, H, W, Cout = 2, 4, 16, 16, 8
    x = jax.random.normal(k1, (N, Cin, H, W), dtype=jnp.float32)
    # Deterministic synthetic Conv2d weight (bias=False); BN affine at init: gamma=1, beta=0.
    weight = 0.1 * jax.random.normal(k2, (Cout, Cin, KH, KW), dtype=jnp.float32)
    gamma = jnp.ones((Cout,), jnp.float32)
    beta = jnp.zeros((Cout,), jnp.float32)

    out = jax.jit(basic_conv)(x, weight, gamma, beta)
    jax.block_until_ready(out)

    assert out.shape == (N, Cout, H, W), out.shape
    ref = _reference(x, weight, gamma, beta)
    max_err = float(jnp.max(jnp.abs(out - ref)))
    # bf16 MXU inputs + bf16 conv intermediate vs full-f32 reference.
    assert jnp.allclose(out, ref, atol=4e-2, rtol=4e-2), max_err

    print("KERNEL_OK")
</pallas_src>

<mosaic_0001>
module attributes {stable_mosaic.version = 11 : i64} {
  func.func @conv_stats_kernel(%arg0: i32, %arg1: memref<16x16x36xbf16, #tpu.memory_space<vmem>>, %arg2: memref<36x128xbf16, #tpu.memory_space<vmem>>, %arg3: memref<256x128xbf16, #tpu.memory_space<vmem>>, %arg4: memref<1x2x128xf32, #tpu.memory_space<vmem>>) attributes {dimension_semantics = [#tpu.dimension_semantics<parallel>], iteration_bounds = array<i64: 2>, scalar_prefetch = 0 : i64, scratch_operands = 0 : i64, tpu.core_type = #tpu.core_type<tc>, window_params = [{transform_indices = @transform_0, window_bounds = array<i64: 16, 16, 36>}, {pipeline_mode = #tpu.pipeline_mode<synchronous>, transform_indices = @transform_1, window_bounds = array<i64: 36, 128>}, {transform_indices = @transform_2, window_bounds = array<i64: 256, 128>}, {transform_indices = @transform_3, window_bounds = array<i64: 1, 2, 128>}]} {
    %c0 = arith.constant 0 : index
    %c0_0 = arith.constant 0 : index
    %c0_1 = arith.constant 0 : index
    %0 = vector.load %arg1[%c0, %c0_0, %c0_1] : memref<16x16x36xbf16, #tpu.memory_space<vmem>>, vector<16x16x36xbf16>
    %1 = vector.shape_cast %0 : vector<16x16x36xbf16> to vector<256x36xbf16>
    %c0_2 = arith.constant 0 : index
    %c0_3 = arith.constant 0 : index
    %2 = vector.load %arg2[%c0_2, %c0_3] : memref<36x128xbf16, #tpu.memory_space<vmem>>, vector<36x128xbf16>
    %cst = arith.constant dense<0.000000e+00> : vector<256x128xf32>
    %3 = tpu.matmul %1, %2, %cst {dimension_numbers = #tpu.dot_dimension_numbers<[1], [0], [0], [1], [0, 0, 1, 1], [], []>} : vector<256x36xbf16>, vector<36x128xbf16>, vector<256x128xf32> -> vector<256x128xf32>
    %4 = arith.truncf %3 : vector<256x128xf32> to vector<256x128xbf16>
    %c0_4 = arith.constant 0 : index
    %c0_5 = arith.constant 0 : index
    %5 = vector.load %arg3[%c0_4, %c0_5] : memref<256x128xbf16, #tpu.memory_space<vmem>>, vector<256x128xbf16>
    tpu.vector_store %arg3[%c0_4, %c0_5], %4 {strides = array<i32>} : memref<256x128xbf16, #tpu.memory_space<vmem>>, vector<256x128xbf16>,
    %cst_6 = arith.constant dense<0.000000e+00> : vector<128xf32>
    %6 = vector.multi_reduction <add>, %3, %cst_6 [0] : vector<256x128xf32> to vector<128xf32>
    %7 = vector.shape_cast %6 : vector<128xf32> to vector<1x128xf32>
    %8 = arith.mulf %3, %3 : vector<256x128xf32>
    %cst_7 = arith.constant dense<0.000000e+00> : vector<128xf32>
    %9 = vector.multi_reduction <add>, %8, %cst_7 [0] : vector<256x128xf32> to vector<128xf32>
    %10 = vector.shape_cast %9 : vector<128xf32> to vector<1x128xf32>
    %11 = tpu.concatenate %7, %10 in 0 : vector<1x128xf32>, vector<1x128xf32> -> vector<2x128xf32>
    %12 = vector.shape_cast %11 : vector<2x128xf32> to vector<1x2x128xf32>
    %c0_8 = arith.constant 0 : index
    %c0_9 = arith.constant 0 : index
    %c0_10 = arith.constant 0 : index
    %13 = vector.load %arg4[%c0_8, %c0_9, %c0_10] : memref<1x2x128xf32, #tpu.memory_space<vmem>>, vector<1x2x128xf32>
    tpu.vector_store %arg4[%c0_8, %c0_9, %c0_10], %12 {strides = array<i32>} : memref<1x2x128xf32, #tpu.memory_space<vmem>>, vector<1x2x128xf32>,
    return
  }
  func.func @transform_0(%arg0: i32) -> (i32, i32, i32) {
    %c0_i32 = arith.constant 0 : i32
    %c0_i32_0 = arith.constant 0 : i32
    %c0_i32_1 = arith.constant 0 : i32
    return %arg0, %c0_i32, %c0_i32_0 : i32, i32, i32
  }
  func.func @transform_1(%arg0: i32) -> (i32, i32) {
    %c0_i32 = arith.constant 0 : i32
    %c0_i32_0 = arith.constant 0 : i32
    %c0_i32_1 = arith.constant 0 : i32
    return %c0_i32, %c0_i32_0 : i32, i32
  }
  func.func @transform_2(%arg0: i32) -> (i32, i32) {
    %c0_i32 = arith.constant 0 : i32
    %c0_i32_0 = arith.constant 0 : i32
    return %arg0, %c0_i32 : i32, i32
  }
  func.func @transform_3(%arg0: i32) -> (i32, i32, i32) {
    %c0_i32 = arith.constant 0 : i32
    %c0_i32_0 = arith.constant 0 : i32
    %c0_i32_1 = arith.constant 0 : i32
    return %arg0, %c0_i32, %c0_i32_0 : i32, i32, i32
  }
}

module attributes {stable_mosaic.version = 11 : i64} {
  func.func @bn_relu_kernel(%arg0: i32, %arg1: memref<256x128xbf16, #tpu.memory_space<vmem>>, %arg2: memref<1x128xf32, #tpu.memory_space<vmem>>, %arg3: memref<1x128xf32, #tpu.memory_space<vmem>>, %arg4: memref<256x128xf32, #tpu.memory_space<vmem>>) attributes {dimension_semantics = [#tpu.dimension_semantics<parallel>], iteration_bounds = array<i64: 2>, scalar_prefetch = 0 : i64, scratch_operands = 0 : i64, tpu.core_type = #tpu.core_type<tc>, window_params = [{transform_indices = @transform_0, window_bounds = array<i64: 256, 128>}, {pipeline_mode = #tpu.pipeline_mode<synchronous>, transform_indices = @transform_1, window_bounds = array<i64: 1, 128>}, {pipeline_mode = #tpu.pipeline_mode<synchronous>, transform_indices = @transform_2, window_bounds = array<i64: 1, 128>}, {transform_indices = @transform_3, window_bounds = array<i64: 256, 128>}]} {
    %c0 = arith.constant 0 : index
    %c0_0 = arith.constant 0 : index
    %0 = vector.load %arg1[%c0, %c0_0] : memref<256x128xbf16, #tpu.memory_space<vmem>>, vector<256x128xbf16>
    %1 = arith.extf %0 : vector<256x128xbf16> to vector<256x128xf32>
    %c0_1 = arith.constant 0 : index
    %c0_2 = arith.constant 0 : index
    %2 = vector.load %arg2[%c0_1, %c0_2] : memref<1x128xf32, #tpu.memory_space<vmem>>, vector<1x128xf32>
    %3 = vector.broadcast %2 : vector<1x128xf32> to vector<256x128xf32>
    %4 = arith.mulf %1, %3 : vector<256x128xf32>
    %c0_3 = arith.constant 0 : index
    %c0_4 = arith.constant 0 : index
    %5 = vector.load %arg3[%c0_3, %c0_4] : memref<1x128xf32, #tpu.memory_space<vmem>>, vector<1x128xf32>
    %6 = vector.broadcast %5 : vector<1x128xf32> to vector<256x128xf32>
    %7 = arith.addf %4, %6 : vector<256x128xf32>
    %cst = arith.constant 0.000000e+00 : f32
    %8 = vector.broadcast %cst : f32 to vector<256x128xf32>
    %9 = arith.cmpf ogt, %7, %8 : vector<256x128xf32>
    %cst_5 = arith.constant 0.00999999977 : f32
    %10 = vector.broadcast %cst_5 : f32 to vector<256x128xf32>
    %11 = arith.mulf %10, %7 : vector<256x128xf32>
    %12 = arith.select %9, %7, %11 : vector<256x128xi1>, vector<256x128xf32>
    %c0_6 = arith.constant 0 : index
    %c0_7 = arith.constant 0 : index
    %13 = vector.load %arg4[%c0_6, %c0_7] : memref<256x128xf32, #tpu.memory_space<vmem>>, vector<256x128xf32>
    tpu.vector_store %arg4[%c0_6, %c0_7], %12 {strides = array<i32>} : memref<256x128xf32, #tpu.memory_space<vmem>>, vector<256x128xf32>,
    return
  }
  func.func @transform_0(%arg0: i32) -> (i32, i32) {
    %c0_i32 = arith.constant 0 : i32
    %c0_i32_0 = arith.constant 0 : i32
    return %arg0, %c0_i32 : i32, i32
  }
  func.func @transform_1(%arg0: i32) -> (i32, i32) {
    %c0_i32 = arith.constant 0 : i32
    %c0_i32_0 = arith.constant 0 : i32
    %c0_i32_1 = arith.constant 0 : i32
    return %c0_i32, %c0_i32_0 : i32, i32
  }
  func.func @transform_2(%arg0: i32) -> (i32, i32) {
    %c0_i32 = arith.constant 0 : i32
    %c0_i32_0 = arith.constant 0 : i32
    %c0_i32_1 = arith.constant 0 : i32
    return %c0_i32, %c0_i32_0 : i32, i32
  }
  func.func @transform_3(%arg0: i32) -> (i32, i32) {
    %c0_i32 = arith.constant 0 : i32
    %c0_i32_0 = arith.constant 0 : i32
    return %arg0, %c0_i32 : i32, i32
  }
}

</mosaic_0001>

<llo_original>
// kernel: basic_conv.2
$region0: #{basic_conv.2}
  #allocation0 [shape = 'u32[]', space=smem, size = 0x4, offset = 0x4, fixed_abs, tag = 'smem constant byte address 0x4 - core index']
  #allocation1 [shape = 'u32[144,128]{1,0:T(1,128)}', space=vmem, size = 0x12000, scoped, tag = 'internal scratch']
  %s0 = inlined_call_operand.vmem [shape: bf16[32,16,36], index: 0, kind: input, shape index: {}]
  %s1 = inlined_call_operand.vmem [shape: bf16[36,128], index: 1, kind: input, shape index: {}]
  %s2 = inlined_call_operand.vmem [shape: bf16[512,128], index: 2, kind: output, shape index: {0}]
  %s3 = inlined_call_operand.vmem [shape: f32[2,2,128], index: 3, kind: output, shape index: {1}]
  %4 = xla_tuple %s2, %s3
  %s5 = sld [smem:[#allocation0]]
  $region49: #{basic_conv.2} parent=0
    _
  %s7 = ssub.s32 1, %s5
  %s8 = scalar_select 0, %s7, %s5
  loop: start=0, step=1, limit=4
  $region2: #{basic_conv.2} parent=0 // loop_pre_header
    _
  $region3: #{basic_conv.2} parent=0 // loop_header
    %s10 = sphi 0, %s14
    %p11 = scmp.ge.s32.totalorder %s10, 4
    %s20 = sphi 0, %s22
    %s23 = sphi 0, %s20
    %s24 = sphi 0, %s23
    %s40 = sphi 0, %s24
    %s44 = sphi 0, %s44
    %s46 = sphi 0, %s44
    %s47 = sphi 0, %s46
    %s61 = sphi 0, %s47
    %s67 = sphi 0, %s69
    %s70 = sphi 0, %s67
    %s71 = sphi 0, %s70
    %s87 = sphi 0, %s71
    %s93 = sphi 0, %s95
    %s96 = sphi 0, %s93
    %s97 = sphi 0, %s96
    %s113 = sphi 0, %s97
  $region4: #{basic_conv.2} parent=0 // loop_header_branch
    %13 = sbr.rel (%p11) target = $region8
  $region5: #{basic_conv.2} parent=0 // loop_body
    %s15 = ssub.s32 %s10, 1
    %s16 = ssub.s32 %s10, 2
    %s17 = sadd.s32 %s10, 1
    %s18 = ssub.s32 %s10, %s17
    %p19 = scmp.eq.s32.totalorder %s18, 0
    %s21 = sadd.s32 %s20, 1
    %s22 = scalar_select %p19, %s20, %s21
    %p25 = pneg %p19
    %p26 = scmp.eq.s32.totalorder %s10, 1
    %p27 = por %p25, %p26
    %p28 = scmp.ne.s32.totalorder %s20, %s23
    %p29 = scmp.eq.s32.totalorder %s10, 0
    %p30 = por %p28, %p29
    %p31 = scmp.ne.s32.totalorder %s20, %s23
    %p32 = scmp.eq.s32.totalorder %s15, 1
    %p33 = por %p31, %p32
    %p34 = scmp.ne.s32.totalorder %s23, %s24
    %p35 = scmp.eq.s32.totalorder %s15, 0
    %p36 = por %p34, %p35
    %p37 = scmp.ne.s32.totalorder %s23, %s24
    %p38 = scmp.eq.s32.totalorder %s16, 1
    %p39 = por %p37, %p38
    %p41 = scmp.ne.s32.totalorder %s24, %s40
    %p42 = scmp.eq.s32.totalorder %s16, 0
    %p43 = por %p41, %p42
    %s45 = sadd.s32 %s44, 1
    %p48 = scmp.eq.s32.totalorder %s10, 1
    %p49 = scmp.ne.s32.totalorder %s44, %s46
    %p50 = scmp.eq.s32.totalorder %s10, 0
    %p51 = por %p49, %p50
    %p52 = scmp.ne.s32.totalorder %s44, %s46
    %p53 = scmp.eq.s32.totalorder %s15, 1
    %p54 = por %p52, %p53
    %p55 = scmp.ne.s32.totalorder %s46, %s47
    %p56 = scmp.eq.s32.totalorder %s15, 0
    %p57 = por %p55, %p56
    %p58 = scmp.ne.s32.totalorder %s46, %s47
    %p59 = scmp.eq.s32.totalorder %s16, 1
    %p60 = por %p58, %p59
    %p62 = scmp.ne.s32.totalorder %s47, %s61
    %p63 = scmp.eq.s32.totalorder %s16, 0
    %p64 = por %p62, %p63
    %s65 = ssub.s32 %s10, %s17
    %p66 = scmp.eq.s32.totalorder %s65, 0
    %s68 = sadd.s32 %s67, 1
    %s69 = scalar_select %p66, %s67, %s68
    %p72 = pneg %p66
    %p73 = scmp.eq.s32.totalorder %s10, 1
    %p74 = por %p72, %p73
    %p75 = scmp.ne.s32.totalorder %s67, %s70
    %p76 = scmp.eq.s32.totalorder %s10, 0
    %p77 = por %p75, %p76
    %p78 = scmp.ne.s32.totalorder %s67, %s70
    %p79 = scmp.eq.s32.totalorder %s15, 1
    %p80 = por %p78, %p79
    %p81 = scmp.ne.s32.totalorder %s70, %s71
    %p82 = scmp.eq.s32.totalorder %s15, 0
    %p83 = por %p81, %p82
    %p84 = scmp.ne.s32.totalorder %s70, %s71
    %p85 = scmp.eq.s32.totalorder %s16, 1
    %p86 = por %p84, %p85
    %p88 = scmp.ne.s32.totalorder %s71, %s87
    %p89 = scmp.eq.s32.totalorder %s16, 0
    %p90 = por %p88, %p89
    %s91 = ssub.s32 %s10, %s17
    %p92 = scmp.eq.s32.totalorder %s91, 0
    %s94 = sadd.s32 %s93, 1
    %s95 = scalar_select %p92, %s93, %s94
    %p98 = pneg %p92
    %p99 = scmp.eq.s32.totalorder %s10, 1
    %p100 = por %p98, %p99
    %p101 = scmp.ne.s32.totalorder %s93, %s96
    %p102 = scmp.eq.s32.totalorder %s10, 0
    %p103 = por %p101, %p102
    %p104 = scmp.ne.s32.totalorder %s93, %s96
    %p105 = scmp.eq.s32.totalorder %s15, 1
    %p106 = por %p104, %p105
    %p107 = scmp.ne.s32.totalorder %s96, %s97
    %p108 = scmp.eq.s32.totalorder %s15, 0
    %p109 = por %p107, %p108
    %p110 = scmp.ne.s32.totalorder %s96, %s97
    %p111 = scmp.eq.s32.totalorder %s16, 1
    %p112 = por %p110, %p111
    %p114 = scmp.ne.s32.totalorder %s97, %s113
    %p115 = scmp.eq.s32.totalorder %s16, 0
    %p116 = por %p114, %p115
    %p117 = scmp.le.s32.totalorder 1, %s10
    %p118 = scmp.lt.s32.totalorder %s10, 3
    %p119 = pnand %p117, %p118
    %p120 = pneg %p119
    // Predicated region
    $region9: #{basic_conv.2} parent=5 // pred_check
      _
    $region10: #{basic_conv.2} parent=5 // pred_check_branch
      %122 = sbr.rel (%p119) target = $region12
    $region11: #{basic_conv.2} parent=5 // pred_region
      %s123 = ssub.s32 %s10, 1
      // Predicated region
      $region13: #{basic_conv.2} parent=11 // pred_check
        %p124 = pneg %p57
      $region14: #{basic_conv.2} parent=11 // pred_check_branch
        %126 = sbr.rel (%p124) target = $region16
      $region15: #{basic_conv.2} parent=11 // pred_region
        _
      $region16: #{basic_conv.2} parent=11 // pred_fallthru
        _
    $region12: #{basic_conv.2} parent=5 // pred_fallthru
      _
    %p127 = scmp.lt.s32.totalorder %s10, 2
    // Predicated region
    $region17: #{basic_conv.2} parent=5 // pred_check
      %p128 = pneg %p127
    $region18: #{basic_conv.2} parent=5 // pred_check_branch
      %130 = sbr.rel (%p128) target = $region20
    $region19: #{basic_conv.2} parent=5 // pred_region
      // Predicated region
      $region21: #{basic_conv.2} parent=19 // pred_check
        %p131 = pneg %p30
      $region22: #{basic_conv.2} parent=19 // pred_check_branch
        %133 = sbr.rel (%p131) target = $region24
      $region23: #{basic_conv.2} parent=19 // pred_region
        %s134 = smul.u32 16, %s10
        %p135 = scmp.lt.s32.totalorder %s134, 31
        %s136 = scalar_select %p135, %s134, 31
        %s137 = smul.addr %s136, 2
        %s138 = smul.addr %s137, 4
        %s139 = scalar_lea.vmem %s0, %s138
        %s140 = smul.u32 16, %s10
      $region24: #{basic_conv.2} parent=19 // pred_fallthru
        _
    $region20: #{basic_conv.2} parent=5 // pred_fallthru
      _
    %p141 = scmp.le.s32.totalorder 1, %s10
    %p142 = scmp.lt.s32.totalorder %s10, 3
    %p143 = pnand %p141, %p142
    %p144 = pneg %p143
    // Predicated region
    $region25: #{basic_conv.2} parent=5 // pred_check
      _
    $region26: #{basic_conv.2} parent=5 // pred_check_branch
      %146 = sbr.rel (%p143) target = $region28
    $region27: #{basic_conv.2} parent=5 // pred_region
      %s147 = ssub.s32 %s10, 1
      %s148 = smul.u32 16, %s15
      %p149 = scmp.lt.s32.totalorder %s148, 31
      %s150 = scalar_select %p149, %s148, 31
      %s151 = smul.addr %s150, 2
      %s152 = smul.addr %s151, 4
      %s153 = scalar_lea.vmem %s0, %s152
      %p154 = pneg %p36
      %p155 = pneg %p33
      %p156 = pneg %p57
      %p157 = pneg %p54
      %p158 = pneg %p83
      %p159 = pneg %p80
      %s160 = smul.u32 32, %s15
      %p161 = scmp.lt.s32.totalorder %s160, 63
      %s162 = scalar_select %p161, %s160, 63
      %s163 = smul.addr %s162, 4
      %s164 = scalar_lea.vmem %s2, %s163
      %p165 = pneg %p109
      %p166 = pneg %p106
      %p167 = scmp.lt.s32.totalorder %s15, 1
      %s168 = scalar_select %p167, %s15, 1
      %s169 = smul.addr %s168, 2
      %s170 = scalar_lea.vmem %s3, %s169
      %s171 = smul.u32 16, %s15
      %p172 = scmp.lt.s32.totalorder %s171, 31
      %s173 = scalar_select %p172, %s171, 31
      %s174 = smul.addr %s173, 2
      %s175 = smul.addr %s174, 4
      %s176 = scalar_lea.vmem %s0, %s175
      %s177 = smul.u32 16, %s15
      %s178 = smul.u32 32, %s15
      %p179 = scmp.lt.s32.totalorder %s178, 63
      %s180 = scalar_select %p179, %s178, 63
      %s181 = smul.addr %s180, 4
      %s182 = scalar_lea.vmem %s2, %s181
      %s183 = smul.u32 32, %s15
      %p184 = scmp.lt.s32.totalorder %s15, 1
      %s185 = scalar_select %p184, %s15, 1
      %s186 = smul.addr %s185, 2
      %s187 = scalar_lea.vmem %s3, %s186
      %v189 = vld [vmem:[%s176] sm:$0xf]
      %v190 = vld [vmem:[%s176 + $0x4] sm:$0xf]
      %v191 = vld [vmem:[%s176 + $0x8] sm:$0xf]
      %v192 = vld [vmem:[%s176 + $0xc] sm:$0xf]
      %v193 = vld [vmem:[%s176 + $0x10] sm:$0xf]
      %v194 = vld [vmem:[%s176 + $0x14] sm:$0xf]
      %v195 = vld [vmem:[%s176 + $0x18] sm:$0xf]
      %v196 = vld [vmem:[%s176 + $0x1c] sm:$0xf]
      %v197 = vld [vmem:[%s176 + $0x20] sm:$0xf]
      %v198 = vld [vmem:[%s176 + $0x24] sm:$0xf]
      %v199 = vld [vmem:[%s176 + $0x28] sm:$0xf]
      %v200 = vld [vmem:[%s176 + $0x2c] sm:$0xf]
      %v201 = vld [vmem:[%s176 + $0x30] sm:$0xf]
      %v202 = vld [vmem:[%s176 + $0x34] sm:$0xf]
      %v203 = vld [vmem:[%s176 + $0x38] sm:$0xf]
      %v204 = vld [vmem:[%s176 + $0x3c] sm:$0xf]
      %v205 = vld [vmem:[%s176 + $0x40] sm:$0xf]
      %v206 = vld [vmem:[%s176 + $0x44] sm:$0xf]
      %v207 = vld [vmem:[%s176 + $0x48] sm:$0xf]
      %v208 = vld [vmem:[%s176 + $0x4c] sm:$0xf]
      %v209 = vld [vmem:[%s176 + $0x50] sm:$0xf]
      %v210 = vld [vmem:[%s176 + $0x54] sm:$0xf]
      %v211 = vld [vmem:[%s176 + $0x58] sm:$0xf]
      %v212 = vld [vmem:[%s176 + $0x5c] sm:$0xf]
      %v213 = vld [vmem:[%s176 + $0x60] sm:$0xf]
      %v214 = vld [vmem:[%s176 + $0x64] sm:$0xf]
      %v215 = vld [vmem:[%s176 + $0x68] sm:$0xf]
      %v216 = vld [vmem:[%s176 + $0x6c] sm:$0xf]
      %v217 = vld [vmem:[%s176 + $0x70] sm:$0xf]
      %v218 = vld [vmem:[%s176 + $0x74] sm:$0xf]
      %v219 = vld [vmem:[%s176 + $0x78] sm:$0xf]
      %v220 = vld [vmem:[%s176 + $0x7c] sm:$0xf]
      %v221 = vld [vmem:[%s1] sm:$0xf]
      %v222 = vld [vmem:[%s1 + $0x4] sm:$0xf]
      %v223 = vld [vmem:[%s1 + $0x8] sm:$0xf]
      %v224 = vld [vmem:[%s1 + $0xc] sm:$0xf]
      %v225 = vld [vmem:[%s1 + $0x10] sm:$0x3]
      %v258 = vunpack.c.l.b16 %v189
      %v259 = vunpack.c.l.b16 %v190
      %v260 = vunpack.c.l.b16 %v191
      %v261 = vunpack.c.l.b16 %v192
      %v262 = vunpack.c.l.b16 %v193
      %v263 = vunpack.c.l.b16 %v194
      %v264 = vunpack.c.l.b16 %v195
      %v265 = vunpack.c.l.b16 %v196
      %v266 = vunpack.c.l.b16 %v197
      %v267 = vunpack.c.l.b16 %v198
      %v268 = vunpack.c.l.b16 %v199
      %v269 = vunpack.c.l.b16 %v200
      %v270 = vunpack.c.l.b16 %v201
      %v271 = vunpack.c.l.b16 %v202
      %v272 = vunpack.c.l.b16 %v203
      %v273 = vunpack.c.l.b16 %v204
      %v274 = vunpack.c.l.b16 %v205
      %v275 = vunpack.c.l.b16 %v206
      %v276 = vunpack.c.l.b16 %v207
      %v277 = vunpack.c.l.b16 %v208
      %v278 = vunpack.c.l.b16 %v209
      %v279 = vunpack.c.l.b16 %v210
      %v280 = vunpack.c.l.b16 %v211
      %v281 = vunpack.c.l.b16 %v212
      %v282 = vunpack.c.l.b16 %v213
      %v283 = vunpack.c.l.b16 %v214
      %v284 = vunpack.c.l.b16 %v215
      %v285 = vunpack.c.l.b16 %v216
      %v286 = vunpack.c.l.b16 %v217
      %v287 = vunpack.c.l.b16 %v218
      %v288 = vunpack.c.l.b16 %v219
      %v289 = vunpack.c.l.b16 %v220
      %v290 = vpack.c.b16 %v259, %v258
      %v291 = vpack.c.b16 %v261, %v260
      %v292 = vpack.c.b16 %v263, %v262
      %v293 = vpack.c.b16 %v265, %v264
      %v294 = vpack.c.b16 %v267, %v266
      %v295 = vpack.c.b16 %v269, %v268
      %v296 = vpack.c.b16 %v271, %v270
      %v297 = vpack.c.b16 %v273, %v272
      %v298 = vpack.c.b16 %v275, %v274
      %v299 = vpack.c.b16 %v277, %v276
      %v300 = vpack.c.b16 %v279, %v278
      %v301 = vpack.c.b16 %v281, %v280
      %v302 = vpack.c.b16 %v283, %v282
      %v303 = vpack.c.b16 %v285, %v284
      %v304 = vpack.c.b16 %v287, %v286
      %v305 = vpack.c.b16 %v289, %v288
      %v311 = vunpack.c.l.b16 %v221
      %v312 = vunpack.c.l.b16 %v222
      %v313 = vunpack.c.l.b16 %v223
      %v314 = vunpack.c.l.b16 %v224
      %v315 = vunpack.c.l.b16 %v225
      %v316 = vpack.c.b16 %v312, %v311
      %v317 = vpack.c.b16 %v314, %v313
      %v318 = vpack.c.b16 %v315, %v315
      %vm321 = vcmask 293888
      %v323 = vsel %vm321, %v290, 0
      %v326 = vsel %vm321, %v291, 0
      %v329 = vsel %vm321, %v292, 0
      %v332 = vsel %vm321, %v293, 0
      %v335 = vsel %vm321, %v294, 0
      %v338 = vsel %vm321, %v295, 0
      %v341 = vsel %vm321, %v296, 0
      %v344 = vsel %vm321, %v297, 0
      %v347 = vsel %vm321, %v298, 0
      %v350 = vsel %vm321, %v299, 0
      %v353 = vsel %vm321, %v300, 0
      %v356 = vsel %vm321, %v301, 0
      %v359 = vsel %vm321, %v302, 0
      %v362 = vsel %vm321, %v303, 0
      %v365 = vsel %vm321, %v304, 0
      %v368 = vsel %vm321, %v305, 0
      %vm370 = vcmask 1041408
      %v372 = vsel %vm370, %v318, 0
      %374 = vmatprep.subr.bf16.mxu0 0
      %375 = vmatpush1.bf16.msra.mxu0 %v316
      %376 = vmatprep.subr.bf16.mxu0 0
      %377 = vmatpush1.bf16.msra.mxu0 %v317
      %378 = vmatprep.subr.bf16.mxu0 0
      %379 = vmatpush1.bf16.msra.mxu0 %v372
      %380 = vmatprep.subr.bf16.mxu0 0
      %381 = vmatpush1.bf16.msra.mxu0 0
      %382 = vmatprep.subr.bf16.mxu0 0
      %383 = vmatpush1.bf16.msra.mxu0 0
      %384 = vmatprep.subr.bf16.mxu0 0
      %385 = vmatpush1.bf16.msra.mxu0 0
      %386 = vmatprep.subr.bf16.mxu0 0
      %387 = vmatpush1.bf16.msra.mxu0 0
      %388 = vmatprep.subr.bf16.mxu0 0
      %389 = vmatpush1.bf16.msra.mxu0 0
      %390 = vmatprep.subr.bf16.mxu0 0
      %391 = vmatpush1.bf16.msra.mxu0 0
      %392 = vmatprep.subr.bf16.mxu0 0
      %393 = vmatpush1.bf16.msra.mxu0 0
      %394 = vmatprep.subr.bf16.mxu0 0
      %395 = vmatpush1.bf16.msra.mxu0 0
      %396 = vmatprep.subr.bf16.mxu0 0
      %397 = vmatpush1.bf16.msra.mxu0 0
      %398 = vmatprep.subr.bf16.mxu0 0
      %399 = vmatpush1.bf16.msra.mxu0 0
      %400 = vmatprep.subr.bf16.mxu0 0
      %401 = vmatpush1.bf16.msra.mxu0 0
      %402 = vmatprep.subr.bf16.mxu0 0
      %403 = vmatpush1.bf16.msra.mxu0 0
      %404 = vmatprep.subr.bf16.mxu0 0
      %405 = vmatpush1.bf16.msra.mxu0 0
      %406 = vmatprep.mubr.bf16.mxu0 0
      %407 = vmatmul.mubr.bf16.gmra.mrb[0].mxu0 %v323
      %v408 = vpop.f32.mrb[0].mxu0
      %v409 = vadd.f32 0.0, %v408
      %v410 = vpop.f32.mrb[0].mxu0
      %v411 = vpop.f32.mrb[0].mxu0
      %v412 = vadd.f32 0.0, %v411
      %v413 = vpop.f32.mrb[0].mxu0
      %414 = vmatprep.mubr.bf16.mxu0 0
      %415 = vmatmul.mubr.bf16.gmra.mrb[0].mxu0 %v326
      %v416 = vpop.f32.mrb[0].mxu0
      %v417 = vadd.f32 0.0, %v416
      %v418 = vpop.f32.mrb[0].mxu0
      %v419 = vpop.f32.mrb[0].mxu0
      %v420 = vadd.f32 0.0, %v419
      %v421 = vpop.f32.mrb[0].mxu0
      %422 = vmatprep.mubr.bf16.mxu0 0
      %423 = vmatmul.mubr.bf16.gmra.mrb[0].mxu0 %v329
      %v424 = vpop.f32.mrb[0].mxu0
      %v425 = vadd.f32 0.0, %v424
      %v426 = vpop.f32.mrb[0].mxu0
      %v427 = vpop.f32.mrb[0].mxu0
      %v428 = vadd.f32 0.0, %v427
      %v429 = vpop.f32.mrb[0].mxu0
      %430 = vmatprep.mubr.bf16.mxu0 0
      %431 = vmatmul.mubr.bf16.gmra.mrb[0].mxu0 %v332
      %v432 = vpop.f32.mrb[0].mxu0
      %v433 = vadd.f32 0.0, %v432
      %v434 = vpop.f32.mrb[0].mxu0
      %v435 = vpop.f32.mrb[0].mxu0
      %v436 = vadd.f32 0.0, %v435
      %v437 = vpop.f32.mrb[0].mxu0
      %438 = vmatprep.mubr.bf16.mxu0 0
      %439 = vmatmul.mubr.bf16.gmra.mrb[0].mxu0 %v335
      %v440 = vpop.f32.mrb[0].mxu0
      %v441 = vadd.f32 0.0, %v440
      %v442 = vpop.f32.mrb[0].mxu0
      %v443 = vpop.f32.mrb[0].mxu0
      %v444 = vadd.f32 0.0, %v443
      %v445 = vpop.f32.mrb[0].mxu0
      %446 = vmatprep.mubr.bf16.mxu0 0
      %447 = vmatmul.mubr.bf16.gmra.mrb[0].mxu0 %v338
      %v448 = vpop.f32.mrb[0].mxu0
      %v449 = vadd.f32 0.0, %v448
      %v450 = vpop.f32.mrb[0].mxu0
      %v451 = vpop.f32.mrb[0].mxu0
      %v452 = vadd.f32 0.0, %v451
      %v453 = vpop.f32.mrb[0].mxu0
      %454 = vmatprep.mubr.bf16.mxu0 0
      %455 = vmatmul.mubr.bf16.gmra.mrb[0].mxu0 %v341
      %v456 = vpop.f32.mrb[0].mxu0
      %v457 = vadd.f32 0.0, %v456
      %v458 = vpop.f32.mrb[0].mxu0
      %v459 = vpop.f32.mrb[0].mxu0
      %v460 = vadd.f32 0.0, %v459
      %v461 = vpop.f32.mrb[0].mxu0
      %462 = vmatprep.mubr.bf16.mxu0 0
      %463 = vmatmul.mubr.bf16.gmra.mrb[0].mxu0 %v344
      %v464 = vpop.f32.mrb[0].mxu0
      %v465 = vadd.f32 0.0, %v464
      %v466 = vpop.f32.mrb[0].mxu0
      %v467 = vpop.f32.mrb[0].mxu0
      %v468 = vadd.f32 0.0, %v467
      %v469 = vpop.f32.mrb[0].mxu0
      %470 = vmatprep.mubr.bf16.mxu0 0
      %471 = vmatmul.mubr.bf16.gmra.mrb[0].mxu0 %v347
      %v472 = vpop.f32.mrb[0].mxu0
      %v473 = vadd.f32 0.0, %v472
      %v474 = vpop.f32.mrb[0].mxu0
      %v475 = vpop.f32.mrb[0].mxu0
      %v476 = vadd.f32 0.0, %v475
      %v477 = vpop.f32.mrb[0].mxu0
      %478 = vmatprep.mubr.bf16.mxu0 0
      %479 = vmatmul.mubr.bf16.gmra.mrb[0].mxu0 %v350
      %v480 = vpop.f32.mrb[0].mxu0
      %v481 = vadd.f32 0.0, %v480
      %v482 = vpop.f32.mrb[0].mxu0
      %v483 = vpop.f32.mrb[0].mxu0
      %v484 = vadd.f32 0.0, %v483
      %v485 = vpop.f32.mrb[0].mxu0
      %486 = vmatprep.mubr.bf16.mxu0 0
      %487 = vmatmul.mubr.bf16.gmra.mrb[0].mxu0 %v353
      %v488 = vpop.f32.mrb[0].mxu0
      %v489 = vadd.f32 0.0, %v488
      %v490 = vpop.f32.mrb[0].mxu0
      %v491 = vpop.f32.mrb[0].mxu0
      %v492 = vadd.f32 0.0, %v491
      %v493 = vpop.f32.mrb[0].mxu0
      %494 = vmatprep.mubr.bf16.mxu0 0
      %495 = vmatmul.mubr.bf16.gmra.mrb[0].mxu0 %v356
      %v496 = vpop.f32.mrb[0].mxu0
      %v497 = vadd.f32 0.0, %v496
      %v498 = vpop.f32.mrb[0].mxu0
      %v499 = vpop.f32.mrb[0].mxu0
      %v500 = vadd.f32 0.0, %v499
      %v501 = vpop.f32.mrb[0].mxu0
      %502 = vmatprep.mubr.bf16.mxu0 0
      %503 = vmatmul.mubr.bf16.gmra.mrb[0].mxu0 %v359
      %v504 = vpop.f32.mrb[0].mxu0
      %v505 = vadd.f32 0.0, %v504
      %v506 = vpop.f32.mrb[0].mxu0
      %v507 = vpop.f32.mrb[0].mxu0
      %v508 = vadd.f32 0.0, %v507
      %v509 = vpop.f32.mrb[0].mxu0
      %510 = vmatprep.mubr.bf16.mxu0 0
      %511 = vmatmul.mubr.bf16.gmra.mrb[0].mxu0 %v362
      %v512 = vpop.f32.mrb[0].mxu0
      %v513 = vadd.f32 0.0, %v512
      %v514 = vpop.f32.mrb[0].mxu0
      %v515 = vpop.f32.mrb[0].mxu0
      %v516 = vadd.f32 0.0, %v515
      %v517 = vpop.f32.mrb[0].mxu0
      %518 = vmatprep.mubr.bf16.mxu0 0
      %519 = vmatmul.mubr.bf16.gmra.mrb[0].mxu0 %v365
      %v520 = vpop.f32.mrb[0].mxu0
      %v521 = vadd.f32 0.0, %v520
      %v522 = vpop.f32.mrb[0].mxu0
      %v523 = vpop.f32.mrb[0].mxu0
      %v524 = vadd.f32 0.0, %v523
      %v525 = vpop.f32.mrb[0].mxu0
      %526 = vmatprep.mubr.bf16.mxu0 0
      %527 = vmatmul.mubr.bf16.gmra.mrb[0].mxu0 %v368
      %v528 = vpop.f32.mrb[0].mxu0
      %v529 = vadd.f32 0.0, %v528
      %v530 = vpop.f32.mrb[0].mxu0
      %v531 = vpop.f32.mrb[0].mxu0
      %v532 = vadd.f32 0.0, %v531
      %v533 = vpop.f32.mrb[0].mxu0
      %534 = vdwg.mxu0
      %v535 = vpack.c.bf16 %v412, %v409
      %v536 = vpack.c.bf16 %v420, %v417
      %v537 = vpack.c.bf16 %v428, %v425
      %v538 = vpack.c.bf16 %v436, %v433
      %v539 = vpack.c.bf16 %v444, %v441
      %v540 = vpack.c.bf16 %v452, %v449
      %v541 = vpack.c.bf16 %v460, %v457
      %v542 = vpack.c.bf16 %v468, %v465
      %v543 = vpack.c.bf16 %v476, %v473
      %v544 = vpack.c.bf16 %v484, %v481
      %v545 = vpack.c.bf16 %v492, %v489
      %v546 = vpack.c.bf16 %v500, %v497
      %v547 = vpack.c.bf16 %v508, %v505
      %v548 = vpack.c.bf16 %v516, %v513
      %v549 = vpack.c.bf16 %v524, %v521
      %v550 = vpack.c.bf16 %v532, %v529
      %v567 = vunpack.c.l.b16 %v535
      %v568 = vunpack.c.h.b16 %v535
      %v569 = vunpack.c.l.b16 %v536
      %v570 = vunpack.c.h.b16 %v536
      %v571 = vunpack.c.l.b16 %v537
      %v572 = vunpack.c.h.b16 %v537
      %v573 = vunpack.c.l.b16 %v538
      %v574 = vunpack.c.h.b16 %v538
      %v575 = vunpack.c.l.b16 %v539
      %v576 = vunpack.c.h.b16 %v539
      %v577 = vunpack.c.l.b16 %v540
      %v578 = vunpack.c.h.b16 %v540
      %v579 = vunpack.c.l.b16 %v541
      %v580 = vunpack.c.h.b16 %v541
      %v581 = vunpack.c.l.b16 %v542
      %v582 = vunpack.c.h.b16 %v542
      %v583 = vunpack.c.l.b16 %v543
      %v584 = vunpack.c.h.b16 %v543
      %v585 = vunpack.c.l.b16 %v544
      %v586 = vunpack.c.h.b16 %v544
      %v587 = vunpack.c.l.b16 %v545
      %v588 = vunpack.c.h.b16 %v545
      %v589 = vunpack.c.l.b16 %v546
      %v590 = vunpack.c.h.b16 %v546
      %v591 = vunpack.c.l.b16 %v547
      %v592 = vunpack.c.h.b16 %v547
      %v593 = vunpack.c.l.b16 %v548
      %v594 = vunpack.c.h.b16 %v548
      %v595 = vunpack.c.l.b16 %v549
      %v596 = vunpack.c.h.b16 %v549
      %v597 = vunpack.c.l.b16 %v550
      %v598 = vunpack.c.h.b16 %v550
      %v599 = vpack.c.b16 %v567, %v567
      %v600 = vpack.c.b16 %v568, %v568
      %v601 = vpack.c.b16 %v569, %v569
      %v602 = vpack.c.b16 %v570, %v570
      %v603 = vpack.c.b16 %v571, %v571
      %v604 = vpack.c.b16 %v572, %v572
      %v605 = vpack.c.b16 %v573, %v573
      %v606 = vpack.c.b16 %v574, %v574
      %v607 = vpack.c.b16 %v575, %v575
      %v608 = vpack.c.b16 %v576, %v576
      %v609 = vpack.c.b16 %v577, %v577
      %v610 = vpack.c.b16 %v578, %v578
      %v611 = vpack.c.b16 %v579, %v579
      %v612 = vpack.c.b16 %v580, %v580
      %v613 = vpack.c.b16 %v581, %v581
      %v614 = vpack.c.b16 %v582, %v582
      %v615 = vpack.c.b16 %v583, %v583
      %v616 = vpack.c.b16 %v584, %v584
      %v617 = vpack.c.b16 %v585, %v585
      %v618 = vpack.c.b16 %v586, %v586
      %v619 = vpack.c.b16 %v587, %v587
      %v620 = vpack.c.b16 %v588, %v588
      %v621 = vpack.c.b16 %v589, %v589
      %v622 = vpack.c.b16 %v590, %v590
      %v623 = vpack.c.b16 %v591, %v591
      %v624 = vpack.c.b16 %v592, %v592
      %v625 = vpack.c.b16 %v593, %v593
      %v626 = vpack.c.b16 %v594, %v594
      %v627 = vpack.c.b16 %v595, %v595
      %v628 = vpack.c.b16 %v596, %v596
      %v629 = vpack.c.b16 %v597, %v597
      %v630 = vpack.c.b16 %v598, %v598
      %663 = vst [vmem:[%s182] sm:$0xf] %v599
      %664 = vst [vmem:[%s182 + $0x4] sm:$0xf] %v600
      %665 = vst [vmem:[%s182 + $0x8] sm:$0xf] %v601
      %666 = vst [vmem:[%s182 + $0xc] sm:$0xf] %v602
      %667 = vst [vmem:[%s182 + $0x10] sm:$0xf] %v603
      %668 = vst [vmem:[%s182 + $0x14] sm:$0xf] %v604
      %669 = vst [vmem:[%s182 + $0x18] sm:$0xf] %v605
      %670 = vst [vmem:[%s182 + $0x1c] sm:$0xf] %v606
      %671 = vst [vmem:[%s182 + $0x20] sm:$0xf] %v607
      %672 = vst [vmem:[%s182 + $0x24] sm:$0xf] %v608
      %673 = vst [vmem:[%s182 + $0x28] sm:$0xf] %v609
      %674 = vst [vmem:[%s182 + $0x2c] sm:$0xf] %v610
      %675 = vst [vmem:[%s182 + $0x30] sm:$0xf] %v611
      %676 = vst [vmem:[%s182 + $0x34] sm:$0xf] %v612
      %677 = vst [vmem:[%s182 + $0x38] sm:$0xf] %v613
      %678 = vst [vmem:[%s182 + $0x3c] sm:$0xf] %v614
      %679 = vst [vmem:[%s182 + $0x40] sm:$0xf] %v615
      %680 = vst [vmem:[%s182 + $0x44] sm:$0xf] %v616
      %681 = vst [vmem:[%s182 + $0x48] sm:$0xf] %v617
      %682 = vst [vmem:[%s182 + $0x4c] sm:$0xf] %v618
      %683 = vst [vmem:[%s182 + $0x50] sm:$0xf] %v619
      %684 = vst [vmem:[%s182 + $0x54] sm:$0xf] %v620
      %685 = vst [vmem:[%s182 + $0x58] sm:$0xf] %v621
      %686 = vst [vmem:[%s182 + $0x5c] sm:$0xf] %v622
      %687 = vst [vmem:[%s182 + $0x60] sm:$0xf] %v623
      %688 = vst [vmem:[%s182 + $0x64] sm:$0xf] %v624
      %689 = vst [vmem:[%s182 + $0x68] sm:$0xf] %v625
      %690 = vst [vmem:[%s182 + $0x6c] sm:$0xf] %v626
      %691 = vst [vmem:[%s182 + $0x70] sm:$0xf] %v627
      %692 = vst [vmem:[%s182 + $0x74] sm:$0xf] %v628
      %693 = vst [vmem:[%s182 + $0x78] sm:$0xf] %v629
      %694 = vst [vmem:[%s182 + $0x7c] sm:$0xf] %v630
      %v695 = vadd.f32 %v409, %v412
      %v696 = vadd.f32 %v695, %v417
      %v697 = vadd.f32 %v696, %v420
      %v698 = vadd.f32 %v697, %v425
      %v699 = vadd.f32 %v698, %v428
      %v700 = vadd.f32 %v699, %v433
      %v701 = vadd.f32 %v700, %v436
      %v702 = vadd.f32 %v701, %v441
      %v703 = vadd.f32 %v702, %v444
      %v704 = vadd.f32 %v703, %v449
      %v705 = vadd.f32 %v704, %v452
      %v706 = vadd.f32 %v705, %v457
      %v707 = vadd.f32 %v706, %v460
      %v708 = vadd.f32 %v707, %v465
      %v709 = vadd.f32 %v708, %v468
      %v710 = vadd.f32 %v709, %v473
      %v711 = vadd.f32 %v710, %v476
      %v712 = vadd.f32 %v711, %v481
      %v713 = vadd.f32 %v712, %v484
      %v714 = vadd.f32 %v713, %v489
      %v715 = vadd.f32 %v714, %v492
      %v716 = vadd.f32 %v715, %v497
      %v717 = vadd.f32 %v716, %v500
      %v718 = vadd.f32 %v717, %v505
      %v719 = vadd.f32 %v718, %v508
      %v720 = vadd.f32 %v719, %v513
      %v721 = vadd.f32 %v720, %v516
      %v722 = vadd.f32 %v721, %v521
      %v723 = vadd.f32 %v722, %v524
      %v724 = vadd.f32 %v723, %v529
      %v725 = vadd.f32 %v724, %v532
      %v726 = vrot.slane %v725, 4
      %v727 = vadd.f32 %v725, %v726
      %v728 = vrot.slane %v727, 2
      %v729 = vadd.f32 %v727, %v728
      %v730 = vrot.slane %v729, 1
      %v731 = vadd.f32 %v729, %v730
      %v732 = vmul.f32 %v409, %v409
      %v733 = vmul.f32 %v412, %v412
      %v734 = vmul.f32 %v417, %v417
      %v735 = vmul.f32 %v420, %v420
      %v736 = vmul.f32 %v425, %v425
      %v737 = vmul.f32 %v428, %v428
      %v738 = vmul.f32 %v433, %v433
      %v739 = vmul.f32 %v436, %v436
      %v740 = vmul.f32 %v441, %v441
      %v741 = vmul.f32 %v444, %v444
      %v742 = vmul.f32 %v449, %v449
      %v743 = vmul.f32 %v452, %v452
      %v744 = vmul.f32 %v457, %v457
      %v745 = vmul.f32 %v460, %v460
      %v746 = vmul.f32 %v465, %v465
      %v747 = vmul.f32 %v468, %v468
      %v748 = vmul.f32 %v473, %v473
      %v749 = vmul.f32 %v476, %v476
      %v750 = vmul.f32 %v481, %v481
      %v751 = vmul.f32 %v484, %v484
      %v752 = vmul.f32 %v489, %v489
      %v753 = vmul.f32 %v492, %v492
      %v754 = vmul.f32 %v497, %v497
      %v755 = vmul.f32 %v500, %v500
      %v756 = vmul.f32 %v505, %v505
      %v757 = vmul.f32 %v508, %v508
      %v758 = vmul.f32 %v513, %v513
      %v759 = vmul.f32 %v516, %v516
      %v760 = vmul.f32 %v521, %v521
      %v761 = vmul.f32 %v524, %v524
      %v762 = vmul.f32 %v529, %v529
      %v763 = vmul.f32 %v532, %v532
      %v764 = vadd.f32 %v732, %v733
      %v765 = vadd.f32 %v764, %v734
      %v766 = vadd.f32 %v765, %v735
      %v767 = vadd.f32 %v766, %v736
      %v768 = vadd.f32 %v767, %v737
      %v769 = vadd.f32 %v768, %v738
      %v770 = vadd.f32 %v769, %v739
      %v771 = vadd.f32 %v770, %v740
      %v772 = vadd.f32 %v771, %v741
      %v773 = vadd.f32 %v772, %v742
      %v774 = vadd.f32 %v773, %v743
      %v775 = vadd.f32 %v774, %v744
      %v776 = vadd.f32 %v775, %v745
      %v777 = vadd.f32 %v776, %v746
      %v778 = vadd.f32 %v777, %v747
      %v779 = vadd.f32 %v778, %v748
      %v780 = vadd.f32 %v779, %v749
      %v781 = vadd.f32 %v780, %v750
      %v782 = vadd.f32 %v781, %v751
      %v783 = vadd.f32 %v782, %v752
      %v784 = vadd.f32 %v783, %v753
      %v785 = vadd.f32 %v784, %v754
      %v786 = vadd.f32 %v785, %v755
      %v787 = vadd.f32 %v786, %v756
      %v788 = vadd.f32 %v787, %v757
      %v789 = vadd.f32 %v788, %v758
      %v790 = vadd.f32 %v789, %v759
      %v791 = vadd.f32 %v790, %v760
      %v792 = vadd.f32 %v791, %v761
      %v793 = vadd.f32 %v792, %v762
      %v794 = vadd.f32 %v793, %v763
      %v795 = vrot.slane %v794, 4
      %v796 = vadd.f32 %v794, %v795
      %v797 = vrot.slane %v796, 2
      %v798 = vadd.f32 %v796, %v797
      %v799 = vrot.slane %v798, 1
      %v800 = vadd.f32 %v798, %v799
      %vm801 = vcmask 1040384
      %v802 = vsel %vm801, %v731, %v800
      %803 = vst [vmem:[%s187] sm:$0x3] %v802
      %s804 = smul.u32 32, %s15
      %p805 = scmp.lt.s32.totalorder %s804, 63
      %s806 = scalar_select %p805, %s804, 63
      %s807 = smul.addr %s806, 4
      %s808 = scalar_lea.vmem %s2, %s807
      %p809 = scmp.lt.s32.totalorder %s15, 1
      %s810 = scalar_select %p809, %s15, 1
      %s811 = smul.addr %s810, 2
      %s812 = scalar_lea.vmem %s3, %s811
      // Predicated region
      $region29: #{basic_conv.2} parent=27 // pred_check
        %p813 = pneg %p80
      $region30: #{basic_conv.2} parent=27 // pred_check_branch
        %815 = sbr.rel (%p813) target = $region32
      $region31: #{basic_conv.2} parent=27 // pred_region
        %s816 = smul.u32 32, %s15
      $region32: #{basic_conv.2} parent=27 // pred_fallthru
        _
      // Predicated region
      $region33: #{basic_conv.2} parent=27 // pred_check
        %p817 = pneg %p106
      $region34: #{basic_conv.2} parent=27 // pred_check_branch
        %819 = sbr.rel (%p817) target = $region36
      $region35: #{basic_conv.2} parent=27 // pred_region
        _
      $region36: #{basic_conv.2} parent=27 // pred_fallthru
        _
    $region28: #{basic_conv.2} parent=5 // pred_fallthru
      _
    %p820 = scmp.le.s32.totalorder 2, %s10
    // Predicated region
    $region37: #{basic_conv.2} parent=5 // pred_check
      %p821 = pneg %p820
    $region38: #{basic_conv.2} parent=5 // pred_check_branch
      %823 = sbr.rel (%p821) target = $region40
    $region39: #{basic_conv.2} parent=5 // pred_region
      %s824 = ssub.s32 %s10, 2
      // Predicated region
      $region41: #{basic_conv.2} parent=39 // pred_check
        %p825 = pneg %p86
      $region42: #{basic_conv.2} parent=39 // pred_check_branch
        %827 = sbr.rel (%p825) target = $region44
      $region43: #{basic_conv.2} parent=39 // pred_region
        %s828 = smul.u32 32, %s16
        %p829 = scmp.lt.s32.totalorder %s828, 63
        %s830 = scalar_select %p829, %s828, 63
        %s831 = smul.addr %s830, 4
        %s832 = scalar_lea.vmem %s2, %s831
      $region44: #{basic_conv.2} parent=39 // pred_fallthru
        _
      // Predicated region
      $region45: #{basic_conv.2} parent=39 // pred_check
        %p833 = pneg %p112
      $region46: #{basic_conv.2} parent=39 // pred_check_branch
        %835 = sbr.rel (%p833) target = $region48
      $region47: #{basic_conv.2} parent=39 // pred_region
        %p836 = scmp.lt.s32.totalorder %s16, 1
        %s837 = scalar_select %p836, %s16, 1
        %s838 = smul.addr %s837, 2
        %s839 = scalar_lea.vmem %s3, %s838
      $region48: #{basic_conv.2} parent=39 // pred_fallthru
        _
    $region40: #{basic_conv.2} parent=5 // pred_fallthru
      _
  $region6: #{basic_conv.2} parent=0 // loop_footer
    %s14 = sadd.s32 1, %s10
  $region7: #{basic_conv.2} parent=0 // loop_footer_branch
    %9 = sbr.rel target = $region3
  $region8: #{basic_conv.2} parent=0 // loop_exit
    _

// kernel: basic_conv.3
$region0: #{basic_conv.3}
  #allocation0 [shape = 'u32[]', space=smem, size = 0x4, offset = 0x4, fixed_abs, tag = 'smem constant byte address 0x4 - core index']
  #allocation1 [shape = 'u32[144,128]{1,0:T(1,128)}', space=vmem, size = 0x12000, scoped, tag = 'internal scratch']
  %s0 = inlined_call_operand.vmem [shape: bf16[512,128], index: 0, kind: input, shape index: {}]
  %s1 = inlined_call_operand.vmem [shape: f32[1,128], index: 1, kind: input, shape index: {}]
  %s2 = inlined_call_operand.vmem [shape: f32[1,128], index: 2, kind: input, shape index: {}]
  %s3 = inlined_call_operand.vmem [shape: f32[512,128], index: 3, kind: output, shape index: {}]
  %s4 = sld [smem:[#allocation0]]
  $region45: #{basic_conv.3} parent=0
    _
  %s6 = ssub.s32 1, %s4
  %s7 = scalar_select 0, %s6, %s4
  loop: start=0, step=1, limit=4
  $region2: #{basic_conv.3} parent=0 // loop_pre_header
    _
  $region3: #{basic_conv.3} parent=0 // loop_header
    %s9 = sphi 0, %s13
    %p10 = scmp.ge.s32.totalorder %s9, 4
    %s19 = sphi 0, %s21
    %s22 = sphi 0, %s19
    %s23 = sphi 0, %s22
    %s39 = sphi 0, %s23
    %s43 = sphi 0, %s43
    %s45 = sphi 0, %s43
    %s46 = sphi 0, %s45
    %s60 = sphi 0, %s46
    %s64 = sphi 0, %s64
    %s66 = sphi 0, %s64
    %s67 = sphi 0, %s66
    %s81 = sphi 0, %s67
    %s87 = sphi 0, %s89
    %s90 = sphi 0, %s87
    %s91 = sphi 0, %s90
    %s107 = sphi 0, %s91
  $region4: #{basic_conv.3} parent=0 // loop_header_branch
    %12 = sbr.rel (%p10) target = $region8
  $region5: #{basic_conv.3} parent=0 // loop_body
    %s14 = ssub.s32 %s9, 1
    %s15 = ssub.s32 %s9, 2
    %s16 = sadd.s32 %s9, 1
    %s17 = ssub.s32 %s9, %s16
    %p18 = scmp.eq.s32.totalorder %s17, 0
    %s20 = sadd.s32 %s19, 1
    %s21 = scalar_select %p18, %s19, %s20
    %p24 = pneg %p18
    %p25 = scmp.eq.s32.totalorder %s9, 1
    %p26 = por %p24, %p25
    %p27 = scmp.ne.s32.totalorder %s19, %s22
    %p28 = scmp.eq.s32.totalorder %s9, 0
    %p29 = por %p27, %p28
    %p30 = scmp.ne.s32.totalorder %s19, %s22
    %p31 = scmp.eq.s32.totalorder %s14, 1
    %p32 = por %p30, %p31
    %p33 = scmp.ne.s32.totalorder %s22, %s23
    %p34 = scmp.eq.s32.totalorder %s14, 0
    %p35 = por %p33, %p34
    %p36 = scmp.ne.s32.totalorder %s22, %s23
    %p37 = scmp.eq.s32.totalorder %s15, 1
    %p38 = por %p36, %p37
    %p40 = scmp.ne.s32.totalorder %s23, %s39
    %p41 = scmp.eq.s32.totalorder %s15, 0
    %p42 = por %p40, %p41
    %s44 = sadd.s32 %s43, 1
    %p47 = scmp.eq.s32.totalorder %s9, 1
    %p48 = scmp.ne.s32.totalorder %s43, %s45
    %p49 = scmp.eq.s32.totalorder %s9, 0
    %p50 = por %p48, %p49
    %p51 = scmp.ne.s32.totalorder %s43, %s45
    %p52 = scmp.eq.s32.totalorder %s14, 1
    %p53 = por %p51, %p52
    %p54 = scmp.ne.s32.totalorder %s45, %s46
    %p55 = scmp.eq.s32.totalorder %s14, 0
    %p56 = por %p54, %p55
    %p57 = scmp.ne.s32.totalorder %s45, %s46
    %p58 = scmp.eq.s32.totalorder %s15, 1
    %p59 = por %p57, %p58
    %p61 = scmp.ne.s32.totalorder %s46, %s60
    %p62 = scmp.eq.s32.totalorder %s15, 0
    %p63 = por %p61, %p62
    %s65 = sadd.s32 %s64, 1
    %p68 = scmp.eq.s32.totalorder %s9, 1
    %p69 = scmp.ne.s32.totalorder %s64, %s66
    %p70 = scmp.eq.s32.totalorder %s9, 0
    %p71 = por %p69, %p70
    %p72 = scmp.ne.s32.totalorder %s64, %s66
    %p73 = scmp.eq.s32.totalorder %s14, 1
    %p74 = por %p72, %p73
    %p75 = scmp.ne.s32.totalorder %s66, %s67
    %p76 = scmp.eq.s32.totalorder %s14, 0
    %p77 = por %p75, %p76
    %p78 = scmp.ne.s32.totalorder %s66, %s67
    %p79 = scmp.eq.s32.totalorder %s15, 1
    %p80 = por %p78, %p79
    %p82 = scmp.ne.s32.totalorder %s67, %s81
    %p83 = scmp.eq.s32.totalorder %s15, 0
    %p84 = por %p82, %p83
    %s85 = ssub.s32 %s9, %s16
    %p86 = scmp.eq.s32.totalorder %s85, 0
    %s88 = sadd.s32 %s87, 1
    %s89 = scalar_select %p86, %s87, %s88
    %p92 = pneg %p86
    %p93 = scmp.eq.s32.totalorder %s9, 1
    %p94 = por %p92, %p93
    %p95 = scmp.ne.s32.totalorder %s87, %s90
    %p96 = scmp.eq.s32.totalorder %s9, 0
    %p97 = por %p95, %p96
    %p98 = scmp.ne.s32.totalorder %s87, %s90
    %p99 = scmp.eq.s32.totalorder %s14, 1
    %p100 = por %p98, %p99
    %p101 = scmp.ne.s32.totalorder %s90, %s91
    %p102 = scmp.eq.s32.totalorder %s14, 0
    %p103 = por %p101, %p102
    %p104 = scmp.ne.s32.totalorder %s90, %s91
    %p105 = scmp.eq.s32.totalorder %s15, 1
    %p106 = por %p104, %p105
    %p108 = scmp.ne.s32.totalorder %s91, %s107
    %p109 = scmp.eq.s32.totalorder %s15, 0
    %p110 = por %p108, %p109
    %p111 = scmp.le.s32.totalorder 1, %s9
    %p112 = scmp.lt.s32.totalorder %s9, 3
    %p113 = pnand %p111, %p112
    %p114 = pneg %p113
    // Predicated region
    $region9: #{basic_conv.3} parent=5 // pred_check
      _
    $region10: #{basic_conv.3} parent=5 // pred_check_branch
      %116 = sbr.rel (%p113) target = $region12
    $region11: #{basic_conv.3} parent=5 // pred_region
      %s117 = ssub.s32 %s9, 1
      // Predicated region
      $region13: #{basic_conv.3} parent=11 // pred_check
        %p118 = pneg %p56
      $region14: #{basic_conv.3} parent=11 // pred_check_branch
        %120 = sbr.rel (%p118) target = $region16
      $region15: #{basic_conv.3} parent=11 // pred_region
        _
      $region16: #{basic_conv.3} parent=11 // pred_fallthru
        _
      // Predicated region
      $region17: #{basic_conv.3} parent=11 // pred_check
        %p121 = pneg %p77
      $region18: #{basic_conv.3} parent=11 // pred_check_branch
        %123 = sbr.rel (%p121) target = $region20
      $region19: #{basic_conv.3} parent=11 // pred_region
        _
      $region20: #{basic_conv.3} parent=11 // pred_fallthru
        _
    $region12: #{basic_conv.3} parent=5 // pred_fallthru
      _
    %p124 = scmp.lt.s32.totalorder %s9, 2
    // Predicated region
    $region21: #{basic_conv.3} parent=5 // pred_check
      %p125 = pneg %p124
    $region22: #{basic_conv.3} parent=5 // pred_check_branch
      %127 = sbr.rel (%p125) target = $region24
    $region23: #{basic_conv.3} parent=5 // pred_region
      // Predicated region
      $region25: #{basic_conv.3} parent=23 // pred_check
        %p128 = pneg %p29
      $region26: #{basic_conv.3} parent=23 // pred_check_branch
        %130 = sbr.rel (%p128) target = $region28
      $region27: #{basic_conv.3} parent=23 // pred_region
        %s131 = smul.u32 32, %s9
        %p132 = scmp.lt.s32.totalorder %s131, 63
        %s133 = scalar_select %p132, %s131, 63
        %s134 = smul.addr %s133, 4
        %s135 = scalar_lea.vmem %s0, %s134
        %s136 = smul.u32 32, %s9
      $region28: #{basic_conv.3} parent=23 // pred_fallthru
        _
    $region24: #{basic_conv.3} parent=5 // pred_fallthru
      _
    %p137 = scmp.le.s32.totalorder 1, %s9
    %p138 = scmp.lt.s32.totalorder %s9, 3
    %p139 = pnand %p137, %p138
    %p140 = pneg %p139
    // Predicated region
    $region29: #{basic_conv.3} parent=5 // pred_check
      _
    $region30: #{basic_conv.3} parent=5 // pred_check_branch
      %142 = sbr.rel (%p139) target = $region32
    $region31: #{basic_conv.3} parent=5 // pred_region
      %s143 = ssub.s32 %s9, 1
      %s144 = smul.u32 32, %s14
      %p145 = scmp.lt.s32.totalorder %s144, 63
      %s146 = scalar_select %p145, %s144, 63
      %s147 = smul.addr %s146, 4
      %s148 = scalar_lea.vmem %s0, %s147
      %p149 = pneg %p35
      %p150 = pneg %p32
      %p151 = pneg %p56
      %p152 = pneg %p53
      %p153 = pneg %p77
      %p154 = pneg %p74
      %p155 = pneg %p103
      %p156 = pneg %p100
      %s157 = smul.u32 32, %s14
      %p158 = scmp.lt.s32.totalorder %s157, 63
      %s159 = scalar_select %p158, %s157, 63
      %s160 = smul.addr %s159, 8
      %s161 = scalar_lea.vmem %s3, %s160
      %s162 = smul.u32 32, %s14
      %p163 = scmp.lt.s32.totalorder %s162, 63
      %s164 = scalar_select %p163, %s162, 63
      %s165 = smul.addr %s164, 4
      %s166 = scalar_lea.vmem %s0, %s165
      %s167 = smul.u32 32, %s14
      %s168 = smul.u32 32, %s14
      %p169 = scmp.lt.s32.totalorder %s168, 63
      %s170 = scalar_select %p169, %s168, 63
      %s171 = smul.addr %s170, 8
      %s172 = scalar_lea.vmem %s3, %s171
      %s173 = smul.u32 32, %s14
      %v174 = vld [vmem:[%s166] sm:$0xf]
      %v175 = vld [vmem:[%s166 + $0x4] sm:$0xf]
      %v176 = vld [vmem:[%s166 + $0x8] sm:$0xf]
      %v177 = vld [vmem:[%s166 + $0xc] sm:$0xf]
      %v178 = vld [vmem:[%s166 + $0x10] sm:$0xf]
      %v179 = vld [vmem:[%s166 + $0x14] sm:$0xf]
      %v180 = vld [vmem:[%s166 + $0x18] sm:$0xf]
      %v181 = vld [vmem:[%s166 + $0x1c] sm:$0xf]
      %v182 = vld [vmem:[%s166 + $0x20] sm:$0xf]
      %v183 = vld [vmem:[%s166 + $0x24] sm:$0xf]
      %v184 = vld [vmem:[%s166 + $0x28] sm:$0xf]
      %v185 = vld [vmem:[%s166 + $0x2c] sm:$0xf]
      %v186 = vld [vmem:[%s166 + $0x30] sm:$0xf]
      %v187 = vld [vmem:[%s166 + $0x34] sm:$0xf]
      %v188 = vld [vmem:[%s166 + $0x38] sm:$0xf]
      %v189 = vld [vmem:[%s166 + $0x3c] sm:$0xf]
      %v190 = vld [vmem:[%s166 + $0x40] sm:$0xf]
      %v191 = vld [vmem:[%s166 + $0x44] sm:$0xf]
      %v192 = vld [vmem:[%s166 + $0x48] sm:$0xf]
      %v193 = vld [vmem:[%s166 + $0x4c] sm:$0xf]
      %v194 = vld [vmem:[%s166 + $0x50] sm:$0xf]
      %v195 = vld [vmem:[%s166 + $0x54] sm:$0xf]
      %v196 = vld [vmem:[%s166 + $0x58] sm:$0xf]
      %v197 = vld [vmem:[%s166 + $0x5c] sm:$0xf]
      %v198 = vld [vmem:[%s166 + $0x60] sm:$0xf]
      %v199 = vld [vmem:[%s166 + $0x64] sm:$0xf]
      %v200 = vld [vmem:[%s166 + $0x68] sm:$0xf]
      %v201 = vld [vmem:[%s166 + $0x6c] sm:$0xf]
      %v202 = vld [vmem:[%s166 + $0x70] sm:$0xf]
      %v203 = vld [vmem:[%s166 + $0x74] sm:$0xf]
      %v204 = vld [vmem:[%s166 + $0x78] sm:$0xf]
      %v205 = vld [vmem:[%s166 + $0x7c] sm:$0xf]
      %v206 = vunpack.c.l.bf16 %v174
      %v207 = vunpack.c.l.bf16 %v175
      %v208 = vunpack.c.l.bf16 %v176
      %v209 = vunpack.c.l.bf16 %v177
      %v210 = vunpack.c.l.bf16 %v178
      %v211 = vunpack.c.l.bf16 %v179
      %v212 = vunpack.c.l.bf16 %v180
      %v213 = vunpack.c.l.bf16 %v181
      %v214 = vunpack.c.l.bf16 %v182
      %v215 = vunpack.c.l.bf16 %v183
      %v216 = vunpack.c.l.bf16 %v184
      %v217 = vunpack.c.l.bf16 %v185
      %v218 = vunpack.c.l.bf16 %v186
      %v219 = vunpack.c.l.bf16 %v187
      %v220 = vunpack.c.l.bf16 %v188
      %v221 = vunpack.c.l.bf16 %v189
      %v222 = vunpack.c.l.bf16 %v190
      %v223 = vunpack.c.l.bf16 %v191
      %v224 = vunpack.c.l.bf16 %v192
      %v225 = vunpack.c.l.bf16 %v193
      %v226 = vunpack.c.l.bf16 %v194
      %v227 = vunpack.c.l.bf16 %v195
      %v228 = vunpack.c.l.bf16 %v196
      %v229 = vunpack.c.l.bf16 %v197
      %v230 = vunpack.c.l.bf16 %v198
      %v231 = vunpack.c.l.bf16 %v199
      %v232 = vunpack.c.l.bf16 %v200
      %v233 = vunpack.c.l.bf16 %v201
      %v234 = vunpack.c.l.bf16 %v202
      %v235 = vunpack.c.l.bf16 %v203
      %v236 = vunpack.c.l.bf16 %v204
      %v237 = vunpack.c.l.bf16 %v205
      %v238 = vld [vmem:[%s1] sm:$0x1]
      %v240 = vlaneseq
      %v241 = vshrl.u32 %v240, 7
      %v242 = vsub.s32 0, %v241
      %v243 = vrot.slane %v238, %v242
      %v245 = vmul.f32 %v206, %v243
      %v246 = vmul.f32 %v207, %v243
      %v247 = vmul.f32 %v208, %v243
      %v248 = vmul.f32 %v209, %v243
      %v249 = vmul.f32 %v210, %v243
      %v250 = vmul.f32 %v211, %v243
      %v251 = vmul.f32 %v212, %v243
      %v252 = vmul.f32 %v213, %v243
      %v253 = vmul.f32 %v214, %v243
      %v254 = vmul.f32 %v215, %v243
      %v255 = vmul.f32 %v216, %v243
      %v256 = vmul.f32 %v217, %v243
      %v257 = vmul.f32 %v218, %v243
      %v258 = vmul.f32 %v219, %v243
      %v259 = vmul.f32 %v220, %v243
      %v260 = vmul.f32 %v221, %v243
      %v261 = vmul.f32 %v222, %v243
      %v262 = vmul.f32 %v223, %v243
      %v263 = vmul.f32 %v224, %v243
      %v264 = vmul.f32 %v225, %v243
      %v265 = vmul.f32 %v226, %v243
      %v266 = vmul.f32 %v227, %v243
      %v267 = vmul.f32 %v228, %v243
      %v268 = vmul.f32 %v229, %v243
      %v269 = vmul.f32 %v230, %v243
      %v270 = vmul.f32 %v231, %v243
      %v271 = vmul.f32 %v232, %v243
      %v272 = vmul.f32 %v233, %v243
      %v273 = vmul.f32 %v234, %v243
      %v274 = vmul.f32 %v235, %v243
      %v275 = vmul.f32 %v236, %v243
      %v276 = vmul.f32 %v237, %v243
      %v277 = vld [vmem:[%s2] sm:$0x1]
      %v279 = vlaneseq
      %v280 = vshrl.u32 %v279, 7
      %v281 = vsub.s32 0, %v280
      %v282 = vrot.slane %v277, %v281
      %v284 = vadd.f32 %v245, %v282
      %v285 = vadd.f32 %v246, %v282
      %v286 = vadd.f32 %v247, %v282
      %v287 = vadd.f32 %v248, %v282
      %v288 = vadd.f32 %v249, %v282
      %v289 = vadd.f32 %v250, %v282
      %v290 = vadd.f32 %v251, %v282
      %v291 = vadd.f32 %v252, %v282
      %v292 = vadd.f32 %v253, %v282
      %v293 = vadd.f32 %v254, %v282
      %v294 = vadd.f32 %v255, %v282
      %v295 = vadd.f32 %v256, %v282
      %v296 = vadd.f32 %v257, %v282
      %v297 = vadd.f32 %v258, %v282
      %v298 = vadd.f32 %v259, %v282
      %v299 = vadd.f32 %v260, %v282
      %v300 = vadd.f32 %v261, %v282
      %v301 = vadd.f32 %v262, %v282
      %v302 = vadd.f32 %v263, %v282
      %v303 = vadd.f32 %v264, %v282
      %v304 = vadd.f32 %v265, %v282
      %v305 = vadd.f32 %v266, %v282
      %v306 = vadd.f32 %v267, %v282
      %v307 = vadd.f32 %v268, %v282
      %v308 = vadd.f32 %v269, %v282
      %v309 = vadd.f32 %v270, %v282
      %v310 = vadd.f32 %v271, %v282
      %v311 = vadd.f32 %v272, %v282
      %v312 = vadd.f32 %v273, %v282
      %v313 = vadd.f32 %v274, %v282
      %v314 = vadd.f32 %v275, %v282
      %v315 = vadd.f32 %v276, %v282
      %vm316 = vcmp.gt.f32.partialorder %v284, 0.0
      %vm317 = vcmp.gt.f32.partialorder %v285, 0.0
      %vm318 = vcmp.gt.f32.partialorder %v286, 0.0
      %vm319 = vcmp.gt.f32.partialorder %v287, 0.0
      %vm320 = vcmp.gt.f32.partialorder %v288, 0.0
      %vm321 = vcmp.gt.f32.partialorder %v289, 0.0
      %vm322 = vcmp.gt.f32.partialorder %v290, 0.0
      %vm323 = vcmp.gt.f32.partialorder %v291, 0.0
      %vm324 = vcmp.gt.f32.partialorder %v292, 0.0
      %vm325 = vcmp.gt.f32.partialorder %v293, 0.0
      %vm326 = vcmp.gt.f32.partialorder %v294, 0.0
      %vm327 = vcmp.gt.f32.partialorder %v295, 0.0
      %vm328 = vcmp.gt.f32.partialorder %v296, 0.0
      %vm329 = vcmp.gt.f32.partialorder %v297, 0.0
      %vm330 = vcmp.gt.f32.partialorder %v298, 0.0
      %vm331 = vcmp.gt.f32.partialorder %v299, 0.0
      %vm332 = vcmp.gt.f32.partialorder %v300, 0.0
      %vm333 = vcmp.gt.f32.partialorder %v301, 0.0
      %vm334 = vcmp.gt.f32.partialorder %v302, 0.0
      %vm335 = vcmp.gt.f32.partialorder %v303, 0.0
      %vm336 = vcmp.gt.f32.partialorder %v304, 0.0
      %vm337 = vcmp.gt.f32.partialorder %v305, 0.0
      %vm338 = vcmp.gt.f32.partialorder %v306, 0.0
      %vm339 = vcmp.gt.f32.partialorder %v307, 0.0
      %vm340 = vcmp.gt.f32.partialorder %v308, 0.0
      %vm341 = vcmp.gt.f32.partialorder %v309, 0.0
      %vm342 = vcmp.gt.f32.partialorder %v310, 0.0
      %vm343 = vcmp.gt.f32.partialorder %v311, 0.0
      %vm344 = vcmp.gt.f32.partialorder %v312, 0.0
      %vm345 = vcmp.gt.f32.partialorder %v313, 0.0
      %vm346 = vcmp.gt.f32.partialorder %v314, 0.0
      %vm347 = vcmp.gt.f32.partialorder %v315, 0.0
      %v348 = vmul.f32 %v284, 0.01
      %v349 = vmul.f32 %v285, 0.01
      %v350 = vmul.f32 %v286, 0.01
      %v351 = vmul.f32 %v287, 0.01
      %v352 = vmul.f32 %v288, 0.01
      %v353 = vmul.f32 %v289, 0.01
      %v354 = vmul.f32 %v290, 0.01
      %v355 = vmul.f32 %v291, 0.01
      %v356 = vmul.f32 %v292, 0.01
      %v357 = vmul.f32 %v293, 0.01
      %v358 = vmul.f32 %v294, 0.01
      %v359 = vmul.f32 %v295, 0.01
      %v360 = vmul.f32 %v296, 0.01
      %v361 = vmul.f32 %v297, 0.01
      %v362 = vmul.f32 %v298, 0.01
      %v363 = vmul.f32 %v299, 0.01
      %v364 = vmul.f32 %v300, 0.01
      %v365 = vmul.f32 %v301, 0.01
      %v366 = vmul.f32 %v302, 0.01
      %v367 = vmul.f32 %v303, 0.01
      %v368 = vmul.f32 %v304, 0.01
      %v369 = vmul.f32 %v305, 0.01
      %v370 = vmul.f32 %v306, 0.01
      %v371 = vmul.f32 %v307, 0.01
      %v372 = vmul.f32 %v308, 0.01
      %v373 = vmul.f32 %v309, 0.01
      %v374 = vmul.f32 %v310, 0.01
      %v375 = vmul.f32 %v311, 0.01
      %v376 = vmul.f32 %v312, 0.01
      %v377 = vmul.f32 %v313, 0.01
      %v378 = vmul.f32 %v314, 0.01
      %v379 = vmul.f32 %v315, 0.01
      %v380 = vsel %vm316, %v284, %v348
      %v381 = vsel %vm317, %v285, %v349
      %v382 = vsel %vm318, %v286, %v350
      %v383 = vsel %vm319, %v287, %v351
      %v384 = vsel %vm320, %v288, %v352
      %v385 = vsel %vm321, %v289, %v353
      %v386 = vsel %vm322, %v290, %v354
      %v387 = vsel %vm323, %v291, %v355
      %v388 = vsel %vm324, %v292, %v356
      %v389 = vsel %vm325, %v293, %v357
      %v390 = vsel %vm326, %v294, %v358
      %v391 = vsel %vm327, %v295, %v359
      %v392 = vsel %vm328, %v296, %v360
      %v393 = vsel %vm329, %v297, %v361
      %v394 = vsel %vm330, %v298, %v362
      %v395 = vsel %vm331, %v299, %v363
      %v396 = vsel %vm332, %v300, %v364
      %v397 = vsel %vm333, %v301, %v365
      %v398 = vsel %vm334, %v302, %v366
      %v399 = vsel %vm335, %v303, %v367
      %v400 = vsel %vm336, %v304, %v368
      %v401 = vsel %vm337, %v305, %v369
      %v402 = vsel %vm338, %v306, %v370
      %v403 = vsel %vm339, %v307, %v371
      %v404 = vsel %vm340, %v308, %v372
      %v405 = vsel %vm341, %v309, %v373
      %v406 = vsel %vm342, %v310, %v374
      %v407 = vsel %vm343, %v311, %v375
      %v408 = vsel %vm344, %v312, %v376
      %v409 = vsel %vm345, %v313, %v377
      %v410 = vsel %vm346, %v314, %v378
      %v411 = vsel %vm347, %v315, %v379
      %412 = vst [vmem:[%s172] sm:$0xff] %v380
      %413 = vst [vmem:[%s172 + $0x8] sm:$0xff] %v381
      %414 = vst [vmem:[%s172 + $0x10] sm:$0xff] %v382
      %415 = vst [vmem:[%s172 + $0x18] sm:$0xff] %v383
      %416 = vst [vmem:[%s172 + $0x20] sm:$0xff] %v384
      %417 = vst [vmem:[%s172 + $0x28] sm:$0xff] %v385
      %418 = vst [vmem:[%s172 + $0x30] sm:$0xff] %v386
      %419 = vst [vmem:[%s172 + $0x38] sm:$0xff] %v387
      %420 = vst [vmem:[%s172 + $0x40] sm:$0xff] %v388
      %421 = vst [vmem:[%s172 + $0x48] sm:$0xff] %v389
      %422 = vst [vmem:[%s172 + $0x50] sm:$0xff] %v390
      %423 = vst [vmem:[%s172 + $0x58] sm:$0xff] %v391
      %424 = vst [vmem:[%s172 + $0x60] sm:$0xff] %v392
      %425 = vst [vmem:[%s172 + $0x68] sm:$0xff] %v393
      %426 = vst [vmem:[%s172 + $0x70] sm:$0xff] %v394
      %427 = vst [vmem:[%s172 + $0x78] sm:$0xff] %v395
      %428 = vst [vmem:[%s172 + $0x80] sm:$0xff] %v396
      %429 = vst [vmem:[%s172 + $0x88] sm:$0xff] %v397
      %430 = vst [vmem:[%s172 + $0x90] sm:$0xff] %v398
      %431 = vst [vmem:[%s172 + $0x98] sm:$0xff] %v399
      %432 = vst [vmem:[%s172 + $0xa0] sm:$0xff] %v400
      %433 = vst [vmem:[%s172 + $0xa8] sm:$0xff] %v401
      %434 = vst [vmem:[%s172 + $0xb0] sm:$0xff] %v402
      %435 = vst [vmem:[%s172 + $0xb8] sm:$0xff] %v403
      %436 = vst [vmem:[%s172 + $0xc0] sm:$0xff] %v404
      %437 = vst [vmem:[%s172 + $0xc8] sm:$0xff] %v405
      %438 = vst [vmem:[%s172 + $0xd0] sm:$0xff] %v406
      %439 = vst [vmem:[%s172 + $0xd8] sm:$0xff] %v407
      %440 = vst [vmem:[%s172 + $0xe0] sm:$0xff] %v408
      %441 = vst [vmem:[%s172 + $0xe8] sm:$0xff] %v409
      %442 = vst [vmem:[%s172 + $0xf0] sm:$0xff] %v410
      %443 = vst [vmem:[%s172 + $0xf8] sm:$0xff] %v411
      %s444 = smul.u32 32, %s14
      %p445 = scmp.lt.s32.totalorder %s444, 63
      %s446 = scalar_select %p445, %s444, 63
      %s447 = smul.addr %s446, 8
      %s448 = scalar_lea.vmem %s3, %s447
      // Predicated region
      $region33: #{basic_conv.3} parent=31 // pred_check
        %p449 = pneg %p100
      $region34: #{basic_conv.3} parent=31 // pred_check_branch
        %451 = sbr.rel (%p449) target = $region36
      $region35: #{basic_conv.3} parent=31 // pred_region
        %s452 = smul.u32 32, %s14
      $region36: #{basic_conv.3} parent=31 // pred_fallthru
        _
    $region32: #{basic_conv.3} parent=5 // pred_fallthru
      _
    %p453 = scmp.le.s32.totalorder 2, %s9
    // Predicated region
    $region37: #{basic_conv.3} parent=5 // pred_check
      %p454 = pneg %p453
    $region38: #{basic_conv.3} parent=5 // pred_check_branch
      %456 = sbr.rel (%p454) target = $region40
    $region39: #{basic_conv.3} parent=5 // pred_region
      %s457 = ssub.s32 %s9, 2
      // Predicated region
      $region41: #{basic_conv.3} parent=39 // pred_check
        %p458 = pneg %p106
      $region42: #{basic_conv.3} parent=39 // pred_check_branch
        %460 = sbr.rel (%p458) target = $region44
      $region43: #{basic_conv.3} parent=39 // pred_region
        %s461 = smul.u32 32, %s15
        %p462 = scmp.lt.s32.totalorder %s461, 63
        %s463 = scalar_select %p462, %s461, 63
        %s464 = smul.addr %s463, 8
        %s465 = scalar_lea.vmem %s3, %s464
      $region44: #{basic_conv.3} parent=39 // pred_fallthru
        _
    $region40: #{basic_conv.3} parent=5 // pred_fallthru
      _
  $region6: #{basic_conv.3} parent=0 // loop_footer
    %s13 = sadd.s32 1, %s9
  $region7: #{basic_conv.3} parent=0 // loop_footer_branch
    %8 = sbr.rel target = $region3
  $region8: #{basic_conv.3} parent=0 // loop_exit
    _

</llo_original>
